<compile_context>
chip_gen: v6e
topology: v6e:2x2x1
jax: 0.10.0
libtpu: 0.0.40
codegen_flags: <defaults>
</compile_context>

<pallas_src>
import functools

import numpy as np
import jax
import jax.numpy as jnp
from jax.experimental import pallas as pl
from jax.experimental.pallas import tpu as pltpu


# -----------------------------------------------------------------------------
# Deterministic parameter init (values straight from the module's __init__).
# -----------------------------------------------------------------------------
RATIO_P = 0.2
RATIO_N = 0.2
RATIO_U = 0.5
RATIO_L = 0.5
RATIO_DLIMIT = 1.0 / 8.0
RATIO_ULIMIT = 1.0 / 4.0
COMPENSATE_RATIO = 0.05


def _active(x, a=0.0, b=1.0):
    # Parameters are deterministic python floats, so the data-dependent python
    # branching of the original `_active` resolves at trace time.
    if x <= a:
        return a + 0.001
    elif x < b:
        return x
    return b - 0.001


# -----------------------------------------------------------------------------
# Constant-matrix builders (plain numpy glue).
# -----------------------------------------------------------------------------
def _cubic_coeffs(t, A=-0.75):
    # PyTorch bicubic kernel (a = -0.75), align_corners=False.
    def k1(x):
        return ((A + 2.0) * x - (A + 3.0)) * x * x + 1.0

    def k2(x):
        return ((A * x - 5.0 * A) * x + 8.0 * A) * x - 4.0 * A

    return (k2(t + 1.0), k1(t), k1(1.0 - t), k2(2.0 - t))


def _bicubic_matrix(n_in):
    """(2*n_in, n_in) matrix U with U @ v == bicubic x2 upsample of v
    (clamped taps, align_corners=False), matching PyTorch upsample_bicubic2d."""
    n_out = 2 * n_in
    U = np.zeros((n_out, n_in), np.float32)
    for i in range(n_out):
        x = (i + 0.5) * 0.5 - 0.5
        fl = int(np.floor(x))
        t = x - fl
        c = _cubic_coeffs(t)
        for m in range(4):
            src = min(max(fl - 1 + m, 0), n_in - 1)
            U[i, src] += c[m]
    return U


# -----------------------------------------------------------------------------
# Pallas kernel
# -----------------------------------------------------------------------------
def _depthhypos_kernel(limits_ref, depth_ref, uh_ref, uwt_ref, out_ref,
                       base_ref, step_ref, *, ndepths, ratio_u, ratio_ulimit,
                       comp, height_first, w2_valid, tile_h, n_row_tiles):
    d_idx = pl.program_id(1)            # depth-hypothesis index
    r_idx = pl.program_id(2)            # output row tile

    # Heavy per-batch work runs exactly once per batch element at the first
    # inner grid step.  base/step persist in VMEM scratch across the two inner
    # axes.  NOTE: correctness relies on the batch axis being OUTERMOST and the
    # d/r axes staying "arbitrary" (never reordered or core-sharded).
    @pl.when((d_idx == 0) & (r_idx == 0))
    def _():
        dlim = limits_ref[0]            # depthhypos_dlimit
        ulim = limits_ref[1]            # depthhypos_ulimit

        d = depth_ref[0]                # (H, Wp)

        # Bicubic x2 upsample as two matmuls against constant interpolation
        # matrices; contraction order picked statically for min MXU FLOPs.
        # TODO(synk): separable 4-tap bicubic stencil on the VPU instead.
        if height_first:
            up = jnp.dot(
                jnp.dot(uh_ref[...], d, preferred_element_type=jnp.float32),
                uwt_ref[...], preferred_element_type=jnp.float32)
        else:
            up = jnp.dot(
                uh_ref[...],
                jnp.dot(d, uwt_ref[...], preferred_element_type=jnp.float32),
                preferred_element_type=jnp.float32)            # (2H, W2p)

        # Four-direction gradients via edge-replicated neighbor shifts:
        # take neighbor min/max first, subtract `up` once.  Edge replication
        # makes the border gradient exactly 0, matching ZeroPad2d semantics.
        left_nb = jnp.concatenate([up[:, :1], up[:, :-1]], axis=1)   # up[:, j-1]
        right_nb = jnp.concatenate([up[:, 1:], up[:, -1:]], axis=1)  # up[:, j+1]
        top_nb = jnp.concatenate([up[:1, :], up[:-1, :]], axis=0)    # up[i-1, :]
        bot_nb = jnp.concatenate([up[1:, :], up[-1:, :]], axis=0)    # up[i+1, :]

        if w2_valid != up.shape[1]:
            # Lane padding was added for store alignment: the true right image
            # border is at column w2_valid - 1, so force zero gradient there
            # (padded columns are cropped by the wrapper and don't matter).
            col = jax.lax.broadcasted_iota(jnp.int32, up.shape, 1)
            right_nb = jnp.where(col <= w2_valid - 2, right_nb, up)

        nb_min = jnp.minimum(jnp.minimum(left_nb, right_nb),
                             jnp.minimum(top_nb, bot_nb))
        nb_max = jnp.maximum(jnp.maximum(left_nb, right_nb),
                             jnp.maximum(top_nb, bot_nb))
        res_min = nb_min - up
        res_max = nb_max - up

        mask_upper = (res_max - res_min) > (ratio_ulimit * ulim)
        res_min = jnp.where(mask_upper, -ratio_u * ulim, res_min)
        res_max = jnp.where(mask_upper, (1.0 - ratio_u) * ulim, res_max)

        mask_npl = ((res_min >= 0.0) | (res_max <= 0.0)
                    | ((res_max - res_min) < dlim))
        res_min = jnp.where(mask_npl, -ratio_u * dlim, res_min)
        res_max = jnp.where(mask_npl, (1.0 - ratio_u) * dlim, res_max)

        res_min = res_min * (1.0 + comp)
        res_max = res_max * (1.0 + comp)

        base_ref[...] = up + res_min
        if ndepths > 1:
            step_ref[...] = (res_max - res_min) * (1.0 / float(ndepths - 1))
        else:
            # Intentional divergence: reference divides by (ndepths - 1),
            # which is undefined for ndepths == 1; we emit step == 0.
            step_ref[...] = jnp.zeros_like(res_min)

    # Steady-state: one lane-dense (tile_h, W2p) slice per grid step
    # (2 vld + 1 fma + 1 unmasked vst per vreg).
    if n_row_tiles == 1:
        base_t = base_ref[...]
        step_t = step_ref[...]
    else:
        row0 = pl.multiple_of(r_idx * tile_h, 8)      # tile_h % 8 == 0 here
        base_t = base_ref[pl.ds(row0, tile_h), :]
        step_t = step_ref[pl.ds(row0, tile_h), :]
    out_ref[0, 0, :, :] = base_t + step_t * d_idx.astype(jnp.float32)


# -----------------------------------------------------------------------------
# Wrappers
# -----------------------------------------------------------------------------
def depth_hypos_initial(ndepths, depth_range):
    # `depth is None` branch of the original forward: trivial arange, plain JAX.
    nbatchs = depth_range.shape[0]
    depth_min = depth_range[0, 0].astype(jnp.float32)
    depth_max = depth_range[0, 1].astype(jnp.float32)
    interval = (depth_max - depth_min) / (ndepths - 1)
    hyp = depth_min + interval * jnp.arange(ndepths, dtype=jnp.float32)
    return jnp.broadcast_to(hyp.reshape(1, ndepths, 1, 1), (nbatchs, ndepths, 1, 1))


def _round_up(x, m):
    return ((x + m - 1) // m) * m


def _pick_row_tile(h2):
    """Largest multiple-of-8 divisor of h2 that is <= 256 (full height when h2
    is small or not sublane aligned)."""
    if h2 % 8 != 0 or h2 <= 256:
        return h2
    best = 8
    t = 8
    while t <= 256:
        if h2 % t == 0:
            best = t
        t += 8
    return best


def _vmem_limit_bytes(H, Wp, H2, W2p, tile_h):
    def tile_bytes(r, c):
        return _round_up(max(r, 1), 8) * _round_up(max(c, 1), 128) * 4

    est = 0
    est += 2 * tile_bytes(H, Wp)        # depth block (double-buffered)
    est += 2 * tile_bytes(H2, H)        # uh  constant (double-buffered)
    est += 2 * tile_bytes(Wp, W2p)      # uwt constant (double-buffered)
    est += 2 * tile_bytes(tile_h, W2p)  # output block (double-buffered)
    est += 2 * tile_bytes(H2, W2p)      # base + step scratch
    # d==0 live set after the gradient rework: up + 4 neighbor shifts + fused
    # min/max/res temporaries -> ~6 full-frame tiles of headroom.
    est += 6 * tile_bytes(H2, W2p)
    est += 4 * 1024 * 1024              # margin for compiler-internal scratch

    # Generation-aware cap: ~85% of physical VMEM (v7x 64 MiB -> ~54 MiB,
    # v5e/v6e 128 MiB -> ~108 MiB).  Never hard-code 64 MiB.
    cap = 64 * 1024 * 1024
    try:
        info = pltpu.get_tpu_info()
        cap = int(getattr(info, "vmem_capacity_bytes", cap))
    except Exception:
        pass
    return int(min(est, int(cap * 0.85)))


def depth_hypos_pallas(depth, ndepths, depth_range, iteration, row_tile=None):
    B, H, W = depth.shape
    H2, W2 = 2 * H, 2 * W

    # Guarantee a 128-multiple lane dimension for every output store: pad the
    # source width with edge replication (reproduces the clamped bicubic taps
    # exactly for the valid columns) and crop the padded columns afterwards.
    W2p = _round_up(W2, 128)
    Wp = W2p // 2
    if Wp != W:
        depth_p = jnp.pad(depth, ((0, 0), (0, 0), (0, Wp - W)), mode="edge")
    else:
        depth_p = depth

    comp = _active(COMPENSATE_RATIO, 0.0, 0.2)
    r_dlim = _active(RATIO_DLIMIT, 0.0, 0.2)
    r_ulim = _active(RATIO_ULIMIT, 0.0, 0.5)
    r_u = _active(RATIO_U)
    # ratio_p / ratio_n / ratio_l are activated by the reference code but unused.
    _ = (_active(RATIO_P), _active(RATIO_N), _active(RATIO_L))

    depth_min = depth_range[0, 0].astype(jnp.float32)
    depth_max = depth_range[0, 1].astype(jnp.float32)
    depth_limit = (depth_max - depth_min) / (2.0 ** (iteration - 1))
    limits = jnp.stack([r_dlim * depth_limit,
                        r_ulim * depth_limit]).astype(jnp.float32)   # (2,)

    uh = jnp.asarray(_bicubic_matrix(H))                 # (2H, H)
    uwt = jnp.asarray(_bicubic_matrix(Wp).T)             # (Wp, 2Wp)

    tile_h = _pick_row_tile(H2) if row_tile is None else int(row_tile)
    assert H2 % tile_h == 0 and (tile_h == H2 or tile_h % 8 == 0)
    n_row_tiles = H2 // tile_h
    height_first = H > Wp                                # min MXU FLOPs

    kernel = functools.partial(
        _depthhypos_kernel, ndepths=ndepths, ratio_u=r_u, ratio_ulimit=r_ulim,
        comp=comp, height_first=height_first, w2_valid=W2, tile_h=tile_h,
        n_row_tiles=n_row_tiles)

    out = pl.pallas_call(
        kernel,
        out_shape=jax.ShapeDtypeStruct((B, ndepths, H2, W2p), jnp.float32),
        grid=(B, ndepths, n_row_tiles),
        in_specs=[
            pl.BlockSpec(memory_space=pltpu.MemorySpace.SMEM),     # limits (2,)
            pl.BlockSpec((1, H, Wp), lambda b, d, r: (b, 0, 0)),   # depth
            pl.BlockSpec((H2, H), lambda b, d, r: (0, 0)),         # uh (const)
            pl.BlockSpec((Wp, W2p), lambda b, d, r: (0, 0)),       # uwt (const)
        ],
        out_specs=pl.BlockSpec((1, 1, tile_h, W2p),
                               lambda b, d, r: (b, d, r, 0)),
        scratch_shapes=[
            pltpu.VMEM((H2, W2p), jnp.float32),   # base = up + res_min
            pltpu.VMEM((H2, W2p), jnp.float32),   # step = intervals
        ],
        compiler_params=pltpu.CompilerParams(
            # b "parallel" (megacore); d and r MUST stay "arbitrary" because
            # base/step are carried across them in VMEM scratch.
            dimension_semantics=("parallel", "arbitrary", "arbitrary"),
            vmem_limit_bytes=_vmem_limit_bytes(H, Wp, H2, W2p, tile_h)),
    )(limits, depth_p, uh, uwt)

    if W2p != W2:
        out = out[:, :, :, :W2]
    return out


# -----------------------------------------------------------------------------
# Pure-JAX reference (faithful to the PyTorch math) for validation.
# -----------------------------------------------------------------------------
def depth_hypos_ref(depth, ndepths, depth_range, iteration):
    comp = _active(COMPENSATE_RATIO, 0.0, 0.2)
    r_dlim = _active(RATIO_DLIMIT, 0.0, 0.2)
    r_ulim = _active(RATIO_ULIMIT, 0.0, 0.5)
    r_u = _active(RATIO_U)

    B, H, W = depth.shape
    depth_min = depth_range[0, 0].astype(jnp.float32)
    depth_max = depth_range[0, 1].astype(jnp.float32)
    depth_limit = (depth_max - depth_min) / (2.0 ** (iteration - 1))
    dlim = r_dlim * depth_limit
    ulim = r_ulim * depth_limit

    uh = jnp.asarray(_bicubic_matrix(H))
    uw = jnp.asarray(_bicubic_matrix(W))
    hp = jax.lax.Precision.HIGHEST
    up = jnp.einsum('ij,bjk,lk->bil', uh, depth, uw, precision=hp)   # (B,2H,2W)

    zc = jnp.zeros_like(up[:, :, :1])
    zr = jnp.zeros_like(up[:, :1, :])
    g_l = jnp.concatenate([zc, up[:, :, :-1] - up[:, :, 1:]], axis=2)
    g_r = jnp.concatenate([up[:, :, 1:] - up[:, :, :-1], zc], axis=2)
    g_u = jnp.concatenate([zr, up[:, :-1, :] - up[:, 1:, :]], axis=1)
    g_d = jnp.concatenate([up[:, 1:, :] - up[:, :-1, :], zr], axis=1)

    res_min = jnp.minimum(jnp.minimum(g_l, g_r), jnp.minimum(g_u, g_d))
    res_max = jnp.maximum(jnp.maximum(g_l, g_r), jnp.maximum(g_u, g_d))

    mask_upper = (res_max - res_min) > (r_ulim * ulim)
    res_min = jnp.where(mask_upper, -r_u * ulim, res_min)
    res_max = jnp.where(mask_upper, (1.0 - r_u) * ulim, res_max)

    mask_npl = (res_min >= 0.0) | (res_max <= 0.0) | ((res_max - res_min) < dlim)
    res_min = jnp.where(mask_npl, -r_u * dlim, res_min)
    res_max = jnp.where(mask_npl, (1.0 - r_u) * dlim, res_max)

    res_min = res_min * (1.0 + comp)
    res_max = res_max * (1.0 + comp)

    intervals = (res_max - res_min) / (ndepths - 1)
    d_idx = jnp.arange(ndepths, dtype=jnp.float32).reshape(1, ndepths, 1, 1)
    return up[:, None] + res_min[:, None] + intervals[:, None] * d_idx


# -----------------------------------------------------------------------------
if __name__ == "__main__":
    B, H, W = 2, 16, 16
    ndepths = 8
    iteration = 2

    key = jax.random.PRNGKey(0)
    depth_min, depth_max = 425.0, 935.0
    depth_range = jnp.broadcast_to(
        jnp.array([depth_min, depth_max], jnp.float32), (B, 2))
    depth = depth_min + (depth_max - depth_min) * jax.random.uniform(
        key, (B, H, W), dtype=jnp.float32)

    # `depth is None` branch (iteration 0) — plain-JAX glue.
    init_hypos = jax.block_until_ready(depth_hypos_initial(ndepths, depth_range))
    assert init_hypos.shape == (B, ndepths, 1, 1)

    ref = jax.block_until_ready(
        depth_hypos_ref(depth, ndepths, depth_range, iteration))

    # Main branch — Pallas kernel (auto row tiling -> single row tile here).
    out = jax.block_until_ready(
        depth_hypos_pallas(depth, ndepths, depth_range, iteration))
    assert out.shape == (B, ndepths, 2 * H, 2 * W)
    assert bool(jnp.all(jnp.isfinite(out)))
    close = np.isclose(np.asarray(out), np.asarray(ref), rtol=1e-3, atol=1e-2)
    # Tiny tolerance for mask-threshold boundary flips (kernel MXU fp32 upsample
    # vs XLA HIGHEST-precision einsum in the reference).
    assert close.mean() > 0.99, f"mismatch fraction {1.0 - close.mean():.5f}"

    # Row-tiled output path (exercises the pl.ds slice of the VMEM scratch).
    out_t = jax.block_until_ready(
        depth_hypos_pallas(depth, ndepths, depth_range, iteration, row_tile=8))
    close_t = np.isclose(np.asarray(out_t), np.asarray(ref), rtol=1e-3, atol=1e-2)
    assert close_t.mean() > 0.99, f"mismatch fraction {1.0 - close_t.mean():.5f}"

    print("KERNEL_OK")
</pallas_src>

<mosaic_0001>
module attributes {stable_mosaic.version = 11 : i64} {
  func.func @_depthhypos_kernel(%arg0: i32, %arg1: i32, %arg2: i32, %arg3: memref<2xf32, #tpu.memory_space<smem>>, %arg4: memref<1x16x64xf32, #tpu.memory_space<vmem>>, %arg5: memref<32x16xf32, #tpu.memory_space<vmem>>, %arg6: memref<64x128xf32, #tpu.memory_space<vmem>>, %arg7: memref<1x1x32x128xf32, #tpu.memory_space<vmem>>, %arg8: memref<32x128xf32, #tpu.memory_space<vmem>>, %arg9: memref<32x128xf32, #tpu.memory_space<vmem>>) attributes {dimension_semantics = [#tpu.dimension_semantics<parallel>, #tpu.dimension_semantics<arbitrary>, #tpu.dimension_semantics<arbitrary>], iteration_bounds = array<i64: 2, 8, 1>, scalar_prefetch = 0 : i64, scratch_operands = 2 : i64, tpu.core_type = #tpu.core_type<tc>, window_params = [{transform_indices = @transform_0, window_bounds = array<i64: 2>}, {transform_indices = @transform_1, window_bounds = array<i64: 1, 16, 64>}, {pipeline_mode = #tpu.pipeline_mode<synchronous>, transform_indices = @transform_2, window_bounds = array<i64: 32, 16>}, {pipeline_mode = #tpu.pipeline_mode<synchronous>, transform_indices = @transform_3, window_bounds = array<i64: 64, 128>}, {transform_indices = @transform_4, window_bounds = array<i64: 1, 1, 32, 128>}]} {
    %c0_i32 = arith.constant 0 : i32
    %0 = arith.cmpi eq, %arg1, %c0_i32 : i32
    %c0_i32_0 = arith.constant 0 : i32
    %1 = arith.cmpi eq, %arg2, %c0_i32_0 : i32
    %2 = arith.andi %0, %1 : i1
    %3 = arith.extui %2 : i1 to i32
    %c0_i32_1 = arith.constant 0 : i32
    %4 = arith.cmpi ne, %3, %c0_i32_1 : i32
    scf.if %4 {
      %c0_9 = arith.constant 0 : index
      %14 = memref.load %arg3[%c0_9] : memref<2xf32, #tpu.memory_space<smem>>
      %c1 = arith.constant 1 : index
      %15 = memref.load %arg3[%c1] : memref<2xf32, #tpu.memory_space<smem>>
      %c0_10 = arith.constant 0 : index
      %c0_11 = arith.constant 0 : index
      %c0_12 = arith.constant 0 : index
      %16 = vector.load %arg4[%c0_10, %c0_11, %c0_12] : memref<1x16x64xf32, #tpu.memory_space<vmem>>, vector<1x16x64xf32>
      %17 = vector.shape_cast %16 : vector<1x16x64xf32> to vector<16x64xf32>
      %c0_13 = arith.constant 0 : index
      %c0_14 = arith.constant 0 : index
      %18 = vector.load %arg5[%c0_13, %c0_14] : memref<32x16xf32, #tpu.memory_space<vmem>>, vector<32x16xf32>
      %c0_15 = arith.constant 0 : index
      %c0_16 = arith.constant 0 : index
      %19 = vector.load %arg6[%c0_15, %c0_16] : memref<64x128xf32, #tpu.memory_space<vmem>>, vector<64x128xf32>
      %cst = arith.constant dense<0.000000e+00> : vector<16x128xf32>
      %20 = tpu.matmul %17, %19, %cst {dimension_numbers = #tpu.dot_dimension_numbers<[1], [0], [0], [1], [0, 0, 1, 1], [], []>} : vector<16x64xf32>, vector<64x128xf32>, vector<16x128xf32> -> vector<16x128xf32>
      %cst_17 = arith.constant dense<0.000000e+00> : vector<32x128xf32>
      %21 = tpu.matmul %18, %20, %cst_17 {dimension_numbers = #tpu.dot_dimension_numbers<[1], [0], [0], [1], [0, 0, 1, 1], [], []>} : vector<32x16xf32>, vector<16x128xf32>, vector<32x128xf32> -> vector<32x128xf32>
      %22 = vector.extract_strided_slice %21 {offsets = [0, 0], sizes = [32, 1], strides = [1, 1]} : vector<32x128xf32> to vector<32x1xf32>
      %23 = vector.extract_strided_slice %21 {offsets = [0, 0], sizes = [32, 127], strides = [1, 1]} : vector<32x128xf32> to vector<32x127xf32>
      %24 = tpu.concatenate %22, %23 in 1 : vector<32x1xf32>, vector<32x127xf32> -> vector<32x128xf32>
      %25 = vector.extract_strided_slice %21 {offsets = [0, 1], sizes = [32, 127], strides = [1, 1]} : vector<32x128xf32> to vector<32x127xf32>
      %26 = vector.extract_strided_slice %21 {offsets = [0, 127], sizes = [32, 1], strides = [1, 1]} : vector<32x128xf32> to vector<32x1xf32>
      %27 = tpu.concatenate %25, %26 in 1 : vector<32x127xf32>, vector<32x1xf32> -> vector<32x128xf32>
      %28 = vector.extract_strided_slice %21 {offsets = [0, 0], sizes = [1, 128], strides = [1, 1]} : vector<32x128xf32> to vector<1x128xf32>
      %29 = vector.extract_strided_slice %21 {offsets = [0, 0], sizes = [31, 128], strides = [1, 1]} : vector<32x128xf32> to vector<31x128xf32>
      %30 = tpu.concatenate %28, %29 in 0 : vector<1x128xf32>, vector<31x128xf32> -> vector<32x128xf32>
      %31 = vector.extract_strided_slice %21 {offsets = [1, 0], sizes = [31, 128], strides = [1, 1]} : vector<32x128xf32> to vector<31x128xf32>
      %32 = vector.extract_strided_slice %21 {offsets = [31, 0], sizes = [1, 128], strides = [1, 1]} : vector<32x128xf32> to vector<1x128xf32>
      %33 = tpu.concatenate %31, %32 in 0 : vector<31x128xf32>, vector<1x128xf32> -> vector<32x128xf32>
      %34 = tpu.iota {dimensions = array<i32: 1>} : vector<32x128xi32>
      %c30_i32 = arith.constant 30 : i32
      %35 = vector.broadcast %c30_i32 : i32 to vector<32x128xi32>
      %36 = arith.cmpi sle, %34, %35 : vector<32x128xi32>
      %37 = arith.select %36, %27, %21 : vector<32x128xi1>, vector<32x128xf32>
      %38 = arith.minimumf %24, %37 : vector<32x128xf32>
      %39 = arith.minimumf %30, %33 : vector<32x128xf32>
      %40 = arith.minimumf %38, %39 : vector<32x128xf32>
      %41 = arith.maximumf %24, %37 : vector<32x128xf32>
      %42 = arith.maximumf %30, %33 : vector<32x128xf32>
      %43 = arith.maximumf %41, %42 : vector<32x128xf32>
      %44 = arith.subf %40, %21 : vector<32x128xf32>
      %45 = arith.subf %43, %21 : vector<32x128xf32>
      %46 = arith.subf %45, %44 : vector<32x128xf32>
      %cst_18 = arith.constant 2.500000e-01 : f32
      %47 = arith.mulf %cst_18, %15 : f32
      %48 = vector.broadcast %47 : f32 to vector<32x128xf32>
      %49 = arith.cmpf ogt, %46, %48 : vector<32x128xf32>
      %cst_19 = arith.constant -5.000000e-01 : f32
      %50 = arith.mulf %cst_19, %15 : f32
      %51 = vector.broadcast %50 : f32 to vector<32x128xf32>
      %52 = arith.select %49, %51, %44 : vector<32x128xi1>, vector<32x128xf32>
      %cst_20 = arith.constant 5.000000e-01 : f32
      %53 = arith.mulf %cst_20, %15 : f32
      %54 = vector.broadcast %53 : f32 to vector<32x128xf32>
      %55 = arith.select %49, %54, %45 : vector<32x128xi1>, vector<32x128xf32>
      %cst_21 = arith.constant 0.000000e+00 : f32
      %56 = vector.broadcast %cst_21 : f32 to vector<32x128xf32>
      %57 = arith.cmpf oge, %52, %56 : vector<32x128xf32>
      %cst_22 = arith.constant 0.000000e+00 : f32
      %58 = vector.broadcast %cst_22 : f32 to vector<32x128xf32>
      %59 = arith.cmpf ole, %55, %58 : vector<32x128xf32>
      %60 = arith.ori %57, %59 : vector<32x128xi1>
      %61 = arith.subf %55, %52 : vector<32x128xf32>
      %62 = vector.broadcast %14 : f32 to vector<32x128xf32>
      %63 = arith.cmpf olt, %61, %62 : vector<32x128xf32>
      %64 = arith.ori %60, %63 : vector<32x128xi1>
      %cst_23 = arith.constant -5.000000e-01 : f32
      %65 = arith.mulf %cst_23, %14 : f32
      %66 = vector.broadcast %65 : f32 to vector<32x128xf32>
      %67 = arith.select %64, %66, %52 : vector<32x128xi1>, vector<32x128xf32>
      %cst_24 = arith.constant 5.000000e-01 : f32
      %68 = arith.mulf %cst_24, %14 : f32
      %69 = vector.broadcast %68 : f32 to vector<32x128xf32>
      %70 = arith.select %64, %69, %55 : vector<32x128xi1>, vector<32x128xf32>
      %cst_25 = arith.constant 1.050000e+00 : f32
      %71 = vector.broadcast %cst_25 : f32 to vector<32x128xf32>
      %72 = arith.mulf %67, %71 : vector<32x128xf32>
      %cst_26 = arith.constant 1.050000e+00 : f32
      %73 = vector.broadcast %cst_26 : f32 to vector<32x128xf32>
      %74 = arith.mulf %70, %73 : vector<32x128xf32>
      %75 = arith.addf %21, %72 : vector<32x128xf32>
      %c0_27 = arith.constant 0 : index
      %c0_28 = arith.constant 0 : index
      %76 = vector.load %arg8[%c0_27, %c0_28] : memref<32x128xf32, #tpu.memory_space<vmem>>, vector<32x128xf32>
      tpu.vector_store %arg8[%c0_27, %c0_28], %75 {strides = array<i32>} : memref<32x128xf32, #tpu.memory_space<vmem>>, vector<32x128xf32>,
      %77 = arith.subf %74, %72 : vector<32x128xf32>
      %cst_29 = arith.constant 0.142857149 : f32
      %78 = vector.broadcast %cst_29 : f32 to vector<32x128xf32>
      %79 = arith.mulf %77, %78 : vector<32x128xf32>
      %c0_30 = arith.constant 0 : index
      %c0_31 = arith.constant 0 : index
      %80 = vector.load %arg9[%c0_30, %c0_31] : memref<32x128xf32, #tpu.memory_space<vmem>>, vector<32x128xf32>
      tpu.vector_store %arg9[%c0_30, %c0_31], %79 {strides = array<i32>} : memref<32x128xf32, #tpu.memory_space<vmem>>, vector<32x128xf32>,
    } else {
    }
    %c0 = arith.constant 0 : index
    %c0_2 = arith.constant 0 : index
    %5 = vector.load %arg8[%c0, %c0_2] : memref<32x128xf32, #tpu.memory_space<vmem>>, vector<32x128xf32>
    %c0_3 = arith.constant 0 : index
    %c0_4 = arith.constant 0 : index
    %6 = vector.load %arg9[%c0_3, %c0_4] : memref<32x128xf32, #tpu.memory_space<vmem>>, vector<32x128xf32>
    %7 = arith.sitofp %arg1 : i32 to f32
    %8 = vector.broadcast %7 : f32 to vector<32x128xf32>
    %9 = arith.mulf %6, %8 : vector<32x128xf32>
    %10 = arith.addf %5, %9 : vector<32x128xf32>
    %c0_5 = arith.constant 0 : index
    %c0_6 = arith.constant 0 : index
    %c0_7 = arith.constant 0 : index
    %c0_8 = arith.constant 0 : index
    %11 = vector.load %arg7[%c0_5, %c0_6, %c0_7, %c0_8] : memref<1x1x32x128xf32, #tpu.memory_space<vmem>>, vector<1x1x32x128xf32>
    %12 = vector.shape_cast %11 : vector<1x1x32x128xf32> to vector<32x128xf32>
    %13 = vector.shape_cast %10 : vector<32x128xf32> to vector<1x1x32x128xf32>
    tpu.vector_store %arg7[%c0_5, %c0_6, %c0_7, %c0_8], %13 {strides = array<i32>} : memref<1x1x32x128xf32, #tpu.memory_space<vmem>>, vector<1x1x32x128xf32>,
    return
  }
  func.func @transform_0(%arg0: i32, %arg1: i32, %arg2: i32) -> i32 {
    %c0_i32 = arith.constant 0 : i32
    %c0_i32_0 = arith.constant 0 : i32
    return %c0_i32 : i32
  }
  func.func @transform_1(%arg0: i32, %arg1: i32, %arg2: i32) -> (i32, i32, i32) {
    %c0_i32 = arith.constant 0 : i32
    %c0_i32_0 = arith.constant 0 : i32
    %c0_i32_1 = arith.constant 0 : i32
    return %arg0, %c0_i32, %c0_i32_0 : i32, i32, i32
  }
  func.func @transform_2(%arg0: i32, %arg1: i32, %arg2: i32) -> (i32, i32) {
    %c0_i32 = arith.constant 0 : i32
    %c0_i32_0 = arith.constant 0 : i32
    %c0_i32_1 = arith.constant 0 : i32
    return %c0_i32, %c0_i32_0 : i32, i32
  }
  func.func @transform_3(%arg0: i32, %arg1: i32, %arg2: i32) -> (i32, i32) {
    %c0_i32 = arith.constant 0 : i32
    %c0_i32_0 = arith.constant 0 : i32
    %c0_i32_1 = arith.constant 0 : i32
    return %c0_i32, %c0_i32_0 : i32, i32
  }
  func.func @transform_4(%arg0: i32, %arg1: i32, %arg2: i32) -> (i32, i32, i32, i32) {
    %c0_i32 = arith.constant 0 : i32
    %c0_i32_0 = arith.constant 0 : i32
    return %arg0, %arg1, %arg2, %c0_i32 : i32, i32, i32, i32
  }
}

</mosaic_0001>

<llo_original>
// kernel: tpu_custom_call.1
$region0: #{tpu_custom_call.1}
  #allocation0 [shape = 'u32[]', space=smem, size = 0x4, offset = 0x4, fixed_abs, tag = 'smem constant byte address 0x4 - core index']
  #allocation1 [shape = 'u32[144,128]{1,0:T(1,128)}', space=vmem, size = 0x12000, scoped, tag = 'internal scratch']
  #allocation2 [shape = 'f32[32,128]{1,0:T(8,128)}', space=vmem, size = 0x4000, scoped, tag = 'scratch operand']
  #allocation3 [shape = 'f32[32,128]{1,0:T(8,128)}', space=vmem, size = 0x4000, scoped, tag = 'scratch operand']
  %s0 = inlined_call_operand.vmem [shape: f32[2], index: 0, kind: input, shape index: {}]
  %s1 = inlined_call_operand.vmem [shape: f32[2,16,64], index: 1, kind: input, shape index: {}]
  %s2 = inlined_call_operand.vmem [shape: f32[32,16], index: 2, kind: input, shape index: {}]
  %s3 = inlined_call_operand.hbm [shape: f32[64,128], index: 3, kind: input, shape index: {}]
  %s4 = inlined_call_operand.hbm [shape: f32[2,8,32,128], index: 4, kind: output, shape index: {}]
  %s5 = sld [smem:[#allocation0]]
  $region61: #{tpu_custom_call.1} parent=0
    _
  %s7 = ssub.s32 1, %s5
  %s8 = scalar_select 0, %s7, %s5
  $region1: #{tpu_custom_call.1} parent=0
    #allocation4 [shape = 'u8[512]{0}', space=smem, size = 0x200, scoped, tag = 'input window, operand 0, single buffered']
    #allocation5 [shape = 's32[2]{0}', space=sflag, size = 0x8, scoped, tag = 'scoped memory for tpu_custom_call.1']
    #allocation6 [shape = 's32[2]{0}', space=sflag, size = 0x8, scoped, tag = 'scoped memory for tpu_custom_call.1']
    #allocation7 [shape = 's32[2]{0}', space=sflag, size = 0x8, scoped, tag = 'scoped memory for tpu_custom_call.1']
    #allocation8 [shape = 'u8[32768]{0}', space=vmem, size = 0x8000, scoped, tag = 'input window, operand 3, single buffered']
    #allocation9 [shape = 'u8[32768]{0}', space=vmem, size = 0x8000, scoped, tag = 'output window, operand 0']
    %9 = vsyncpa [#allocation7], 0
    %10 = vsyncpa [#allocation5], 0
    %11 = vsyncpa [#allocation6], 0
    %s12 = scalar_lea.sflag [#allocation6], 1
    %13 = vsyncpa %s12, 0
    loop: start=0, step=1, limit=18
    $region2: #{tpu_custom_call.1} parent=1 // loop_pre_header
      _
    $region3: #{tpu_custom_call.1} parent=1 // loop_header
      %s15 = sphi 0, %s19
      %p16 = scmp.ge.s32.totalorder %s15, 18
      %s22 = sphi 0, %s41
      %s23 = sphi 0, %s37
      %s24 = sphi 0, %s33
      %s25 = sphi 0, %s22
      %s26 = sphi 0, %s23
      %s27 = sphi 0, %s24
      %s28 = sphi 0, %s25
      %s29 = sphi 0, %s26
      %s30 = sphi 0, %s27
      %s42 = sphi 0, %s42
      %s44 = sphi 0, %s42
      %s45 = sphi 0, %s44
      %s59 = sphi 0, %s45
      %s65 = sphi 0, %s67
      %s68 = sphi 0, %s65
      %s69 = sphi 0, %s68
      %s85 = sphi 0, %s69
      %s89 = sphi 0, %s89
      %s91 = sphi 0, %s89
      %s92 = sphi 0, %s91
      %s106 = sphi 0, %s92
      %s110 = sphi 0, %s110
      %s112 = sphi 0, %s110
      %s113 = sphi 0, %s112
      %s127 = sphi 0, %s113
      %s137 = sphi 0, %s139
      %s140 = sphi 0, %s137
      %s141 = sphi 0, %s140
      %s157 = sphi 0, %s141
    $region4: #{tpu_custom_call.1} parent=1 // loop_header_branch
      %18 = sbr.rel (%p16) target = $region8
    $region5: #{tpu_custom_call.1} parent=1 // loop_body
      %s20 = ssub.s32 %s15, 1
      %s21 = ssub.s32 %s15, 2
      %s31 = sadd.s32 1, %s24
      %p32 = scmp.ge.s32.totalorder %s31, 1
      %s33 = scalar_select %p32, 0, %s31
      %s34 = sadd.s32 1, %s23
      %s35 = scalar_select %p32, %s34, %s23
      %p36 = scmp.ge.s32.totalorder %s35, 8
      %s37 = scalar_select %p36, 0, %s35
      %s38 = sadd.s32 1, %s22
      %s39 = scalar_select %p36, %s38, %s22
      %p40 = scmp.ge.s32.totalorder %s39, 2
      %s41 = scalar_select %p40, 0, %s39
      %s43 = sadd.s32 %s42, 1
      %p46 = scmp.eq.s32.totalorder %s15, 15
      %p47 = scmp.ne.s32.totalorder %s42, %s44
      %p48 = scmp.eq.s32.totalorder %s15, 0
      %p49 = por %p47, %p48
      %p50 = scmp.ne.s32.totalorder %s42, %s44
      %p51 = scmp.eq.s32.totalorder %s20, 15
      %p52 = por %p50, %p51
      %p53 = scmp.ne.s32.totalorder %s44, %s45
      %p54 = scmp.eq.s32.totalorder %s20, 0
      %p55 = por %p53, %p54
      %p56 = scmp.ne.s32.totalorder %s44, %s45
      %p57 = scmp.eq.s32.totalorder %s21, 15
      %p58 = por %p56, %p57
      %p60 = scmp.ne.s32.totalorder %s45, %s59
      %p61 = scmp.eq.s32.totalorder %s21, 0
      %p62 = por %p60, %p61
      %s63 = ssub.s32 %s22, %s41
      %p64 = scmp.eq.s32.totalorder %s63, 0
      %s66 = sadd.s32 %s65, 1
      %s67 = scalar_select %p64, %s65, %s66
      %p70 = pneg %p64
      %p71 = scmp.eq.s32.totalorder %s15, 15
      %p72 = por %p70, %p71
      %p73 = scmp.ne.s32.totalorder %s65, %s68
      %p74 = scmp.eq.s32.totalorder %s15, 0
      %p75 = por %p73, %p74
      %p76 = scmp.ne.s32.totalorder %s65, %s68
      %p77 = scmp.eq.s32.totalorder %s20, 15
      %p78 = por %p76, %p77
      %p79 = scmp.ne.s32.totalorder %s68, %s69
      %p80 = scmp.eq.s32.totalorder %s20, 0
      %p81 = por %p79, %p80
      %p82 = scmp.ne.s32.totalorder %s68, %s69
      %p83 = scmp.eq.s32.totalorder %s21, 15
      %p84 = por %p82, %p83
      %p86 = scmp.ne.s32.totalorder %s69, %s85
      %p87 = scmp.eq.s32.totalorder %s21, 0
      %p88 = por %p86, %p87
      %s90 = sadd.s32 %s89, 1
      %p93 = scmp.eq.s32.totalorder %s15, 15
      %p94 = scmp.ne.s32.totalorder %s89, %s91
      %p95 = scmp.eq.s32.totalorder %s15, 0
      %p96 = por %p94, %p95
      %p97 = scmp.ne.s32.totalorder %s89, %s91
      %p98 = scmp.eq.s32.totalorder %s20, 15
      %p99 = por %p97, %p98
      %p100 = scmp.ne.s32.totalorder %s91, %s92
      %p101 = scmp.eq.s32.totalorder %s20, 0
      %p102 = por %p100, %p101
      %p103 = scmp.ne.s32.totalorder %s91, %s92
      %p104 = scmp.eq.s32.totalorder %s21, 15
      %p105 = por %p103, %p104
      %p107 = scmp.ne.s32.totalorder %s92, %s106
      %p108 = scmp.eq.s32.totalorder %s21, 0
      %p109 = por %p107, %p108
      %s111 = sadd.s32 %s110, 1
      %p114 = scmp.eq.s32.totalorder %s15, 15
      %p115 = scmp.ne.s32.totalorder %s110, %s112
      %p116 = scmp.eq.s32.totalorder %s15, 0
      %p117 = por %p115, %p116
      %p118 = scmp.ne.s32.totalorder %s110, %s112
      %p119 = scmp.eq.s32.totalorder %s20, 15
      %p120 = por %p118, %p119
      %p121 = scmp.ne.s32.totalorder %s112, %s113
      %p122 = scmp.eq.s32.totalorder %s20, 0
      %p123 = por %p121, %p122
      %p124 = scmp.ne.s32.totalorder %s112, %s113
      %p125 = scmp.eq.s32.totalorder %s21, 15
      %p126 = por %p124, %p125
      %p128 = scmp.ne.s32.totalorder %s113, %s127
      %p129 = scmp.eq.s32.totalorder %s21, 0
      %p130 = por %p128, %p129
      %s131 = ssub.s32 %s22, %s41
      %s132 = ssub.s32 %s23, %s37
      %s133 = sor.u32 %s131, %s132
      %s134 = ssub.s32 %s24, %s33
      %s135 = sor.u32 %s133, %s134
      %p136 = scmp.eq.s32.totalorder %s135, 0
      %s138 = sadd.s32 %s137, 1
      %s139 = scalar_select %p136, %s137, %s138
      %p142 = pneg %p136
      %p143 = scmp.eq.s32.totalorder %s15, 15
      %p144 = por %p142, %p143
      %p145 = scmp.ne.s32.totalorder %s137, %s140
      %p146 = scmp.eq.s32.totalorder %s15, 0
      %p147 = por %p145, %p146
      %p148 = scmp.ne.s32.totalorder %s137, %s140
      %p149 = scmp.eq.s32.totalorder %s20, 15
      %p150 = por %p148, %p149
      %p151 = scmp.ne.s32.totalorder %s140, %s141
      %p152 = scmp.eq.s32.totalorder %s20, 0
      %p153 = por %p151, %p152
      %p154 = scmp.ne.s32.totalorder %s140, %s141
      %p155 = scmp.eq.s32.totalorder %s21, 15
      %p156 = por %p154, %p155
      %p158 = scmp.ne.s32.totalorder %s141, %s157
      %p159 = scmp.eq.s32.totalorder %s21, 0
      %p160 = por %p158, %p159
      %p161 = scmp.le.s32.totalorder 1, %s15
      %p162 = scmp.lt.s32.totalorder %s15, 17
      %p163 = pnand %p161, %p162
      %p164 = pneg %p163
      // Predicated region
      $region9: #{tpu_custom_call.1} parent=5 // pred_check
        _
      $region10: #{tpu_custom_call.1} parent=5 // pred_check_branch
        %166 = sbr.rel (%p163) target = $region12
      $region11: #{tpu_custom_call.1} parent=5 // pred_region
        %s167 = ssub.s32 %s15, 1
        // Predicated region
        $region13: #{tpu_custom_call.1} parent=11 // pred_check
          %p168 = pneg %p55
        $region14: #{tpu_custom_call.1} parent=11 // pred_check_branch
          %170 = sbr.rel (%p168) target = $region16
        $region15: #{tpu_custom_call.1} parent=11 // pred_region
          %s172 = ssub.s32 16, 16
          %173 = vsyncadd [#allocation7], %s172
          %s175 = sshll.u32 %s0, 4
          %s176 = int_to_ptr.vmem [resolvable:$true] %s175
          %178 = dma.vmem_to_smem %s176, 16, [#allocation4], [#allocation7]
        $region16: #{tpu_custom_call.1} parent=11 // pred_fallthru
          _
        // Predicated region
        $region17: #{tpu_custom_call.1} parent=11 // pred_check
          %p179 = pneg %p102
        $region18: #{tpu_custom_call.1} parent=11 // pred_check_branch
          %181 = sbr.rel (%p179) target = $region20
        $region19: #{tpu_custom_call.1} parent=11 // pred_region
          _
        $region20: #{tpu_custom_call.1} parent=11 // pred_fallthru
          _
        // Predicated region
        $region21: #{tpu_custom_call.1} parent=11 // pred_check
          %p182 = pneg %p123
        $region22: #{tpu_custom_call.1} parent=11 // pred_check_branch
          %184 = sbr.rel (%p182) target = $region24
        $region23: #{tpu_custom_call.1} parent=11 // pred_region
          %s186 = ssub.s32 1024, 1024
          %187 = vsyncadd [#allocation5], %s186
          %s188 = sshll.u32 [#allocation8], 4
          %s189 = int_to_ptr.vmem [resolvable:$true] %s188
          %194 = dma.hbm_to_vmem [thread:$0]  %s3, 1024, %s189, [#allocation5], 128, 128, 8
        $region24: #{tpu_custom_call.1} parent=11 // pred_fallthru
          _
      $region12: #{tpu_custom_call.1} parent=5 // pred_fallthru
        _
      %p195 = scmp.lt.s32.totalorder %s15, 16
      // Predicated region
      $region25: #{tpu_custom_call.1} parent=5 // pred_check
        %p196 = pneg %p195
      $region26: #{tpu_custom_call.1} parent=5 // pred_check_branch
        %198 = sbr.rel (%p196) target = $region28
      $region27: #{tpu_custom_call.1} parent=5 // pred_region
        // Predicated region
        $region29: #{tpu_custom_call.1} parent=27 // pred_check
          %p199 = pneg %p75
        $region30: #{tpu_custom_call.1} parent=27 // pred_check_branch
          %201 = sbr.rel (%p199) target = $region32
        $region31: #{tpu_custom_call.1} parent=27 // pred_region
          %p202 = scmp.lt.s32.totalorder %s22, 1
          %s203 = scalar_select %p202, %s22, 1
          %s204 = smul.addr %s203, 2
          %s205 = smul.addr %s204, 8
          %s206 = scalar_lea.vmem %s1, %s205
        $region32: #{tpu_custom_call.1} parent=27 // pred_fallthru
          _
      $region28: #{tpu_custom_call.1} parent=5 // pred_fallthru
        _
      %p207 = scmp.le.s32.totalorder 1, %s15
      %p208 = scmp.lt.s32.totalorder %s15, 17
      %p209 = pnand %p207, %p208
      %p210 = pneg %p209
      // Predicated region
      $region33: #{tpu_custom_call.1} parent=5 // pred_check
        _
      $region34: #{tpu_custom_call.1} parent=5 // pred_check_branch
        %212 = sbr.rel (%p209) target = $region36
      $region35: #{tpu_custom_call.1} parent=5 // pred_region
        %s213 = ssub.s32 %s15, 1
        // Predicated region
        $region37: #{tpu_custom_call.1} parent=35 // pred_check
          %p214 = pneg %p55
        $region38: #{tpu_custom_call.1} parent=35 // pred_check_branch
          %216 = sbr.rel (%p214) target = $region40
        $region39: #{tpu_custom_call.1} parent=35 // pred_region
          %217 = dma.done [#allocation7], 16
        $region40: #{tpu_custom_call.1} parent=35 // pred_fallthru
          _
        // Predicated region
        $region41: #{tpu_custom_call.1} parent=35 // pred_check
          %p218 = pneg %p123
        $region42: #{tpu_custom_call.1} parent=35 // pred_check_branch
          %220 = sbr.rel (%p218) target = $region44
        $region43: #{tpu_custom_call.1} parent=35 // pred_region
          %221 = dma.done [#allocation5], 1024
        $region44: #{tpu_custom_call.1} parent=35 // pred_fallthru
          _
        %222 = sfence
        %p223 = pneg %p55
        %p224 = pneg %p52
        %p225 = scmp.lt.s32.totalorder %s25, 1
        %s226 = scalar_select %p225, %s25, 1
        %s227 = smul.addr %s226, 2
        %s228 = smul.addr %s227, 8
        %s229 = scalar_lea.vmem %s1, %s228
        %p230 = pneg %p81
        %p231 = pneg %p78
        %p232 = pneg %p102
        %p233 = pneg %p99
        %p234 = pneg %p123
        %p235 = pneg %p120
        %p236 = pneg %p153
        %p237 = pneg %p150
        %s238 = sand.u32 %s140, 1
        %s239 = scalar_lea.sflag [#allocation6], %s238
        %s240 = sand.u32 %s140, 1
        %s241 = smul.addr %s240, 32
        %s242 = scalar_lea.vmem [#allocation9], %s241
        %p243 = scmp.lt.s32.totalorder %s25, 1
        %s244 = scalar_select %p243, %s25, 1
        %s245 = smul.addr %s244, 2
        %s246 = smul.addr %s245, 8
        %s247 = scalar_lea.vmem %s1, %s246
        %s248 = smul.u32 4, %s27
        %p249 = scmp.eq.s32.totalorder %s26, 0
        %p250 = scmp.eq.s32.totalorder %s27, 0
        %p251 = pnand %p249, %p250
        %p252 = pneg %p251
        // Predicated region
        $region45: #{tpu_custom_call.1} parent=35 // pred_check
          _
        $region46: #{tpu_custom_call.1} parent=35 // pred_check_branch
          %254 = sbr.rel (%p251) target = $region48
        $region47: #{tpu_custom_call.1} parent=35 // pred_region
          %s255 = sld [smem:[#allocation4]]
          %s256 = sld [smem:[#allocation4 + $0x1]]
          %v257 = vld [vmem:[%s247] sm:$0xff]
          %v258 = vld [vmem:[%s247 + $0x8] sm:$0xff]
          %v259 = vld [vmem:[%s2] sm:$0xff]
          %v260 = vld [vmem:[%s2 + $0x8] sm:$0xff]
          %v261 = vld [vmem:[%s2 + $0x10] sm:$0xff]
          %v262 = vld [vmem:[%s2 + $0x18] sm:$0xff]
          %v263 = vld [vmem:[#allocation8] sm:$0xff]
          %v264 = vld [vmem:[#allocation8 + $0x8] sm:$0xff]
          %v265 = vld [vmem:[#allocation8 + $0x10] sm:$0xff]
          %v266 = vld [vmem:[#allocation8 + $0x18] sm:$0xff]
          %v267 = vld [vmem:[#allocation8 + $0x20] sm:$0xff]
          %v268 = vld [vmem:[#allocation8 + $0x28] sm:$0xff]
          %v269 = vld [vmem:[#allocation8 + $0x30] sm:$0xff]
          %v270 = vld [vmem:[#allocation8 + $0x38] sm:$0xff]
          %vm271 = vcmask 523264
          %v273 = vsel %vm271, %v257, 0
          %v276 = vsel %vm271, %v258, 0
          %278 = vmatprep.subr.mxu0 0.0
          %279 = vmatpush1.msra.mxu0 0.0
          %280 = vmatprep.subr.mxu0 0.0
          %281 = vmatpush1.msra.mxu0 0.0
          %282 = vmatprep.subr.mxu0 0.0
          %283 = vmatpush1.msra.mxu0 0.0
          %284 = vmatprep.subr.mxu0 0.0
          %285 = vmatpush1.msra.mxu0 0.0
          %286 = vmatprep.subr.mxu0 0.0
          %287 = vmatpush1.msra.mxu0 0.0
          %288 = vmatprep.subr.mxu0 0.0
          %289 = vmatpush1.msra.mxu0 0.0
          %290 = vmatprep.subr.mxu0 0.0
          %291 = vmatpush1.msra.mxu0 0.0
          %292 = vmatprep.subr.mxu0 0.0
          %293 = vmatpush1.msra.mxu0 0.0
          %294 = vmatprep.subr.mxu0 0.0
          %295 = vmatpush1.msra.mxu0 %v270
          %296 = vmatprep.subr.mxu0 0.0
          %297 = vmatpush1.msra.mxu0 %v269
          %298 = vmatprep.subr.mxu0 0.0
          %299 = vmatpush1.msra.mxu0 %v268
          %300 = vmatprep.subr.mxu0 0.0
          %301 = vmatpush1.msra.mxu0 %v267
          %302 = vmatprep.subr.mxu0 0.0
          %303 = vmatpush1.msra.mxu0 %v266
          %304 = vmatprep.subr.mxu0 0.0
          %305 = vmatpush1.msra.mxu0 %v265
          %306 = vmatprep.subr.mxu0 0.0
          %307 = vmatpush1.msra.mxu0 %v264
          %308 = vmatprep.subr.mxu0 0.0
          %309 = vmatpush1.msra.mxu0 %v263
          %310 = vmatprep.subr.mxu0 0.0
          %311 = vmatpush2.msra.mxu0 0.0
          %312 = vmatprep.subr.mxu0 0.0
          %313 = vmatpush2.msra.mxu0 0.0
          %314 = vmatprep.subr.mxu0 0.0
          %315 = vmatpush2.msra.mxu0 0.0
          %316 = vmatprep.subr.mxu0 0.0
          %317 = vmatpush2.msra.mxu0 0.0
          %318 = vmatprep.subr.mxu0 0.0
          %319 = vmatpush2.msra.mxu0 0.0
          %320 = vmatprep.subr.mxu0 0.0
          %321 = vmatpush2.msra.mxu0 0.0
          %322 = vmatprep.subr.mxu0 0.0
          %323 = vmatpush2.msra.mxu0 0.0
          %324 = vmatprep.subr.mxu0 0.0
          %325 = vmatpush2.msra.mxu0 0.0
          %326 = vmatprep.subr.mxu0 0.0
          %327 = vmatpush2.msra.mxu0 0.0
          %328 = vmatprep.subr.mxu0 0.0
          %329 = vmatpush2.msra.mxu0 0.0
          %330 = vmatprep.subr.mxu0 0.0
          %331 = vmatpush2.msra.mxu0 0.0
          %332 = vmatprep.subr.mxu0 0.0
          %333 = vmatpush2.msra.mxu0 0.0
          %334 = vmatprep.subr.mxu0 0.0
          %335 = vmatpush2.msra.mxu0 0.0
          %336 = vmatprep.subr.mxu0 0.0
          %337 = vmatpush2.msra.mxu0 0.0
          %338 = vmatprep.subr.mxu0 0.0
          %339 = vmatpush2.msra.mxu0 0.0
          %340 = vmatprep.subr.mxu0 0.0
          %341 = vmatpush2.msra.mxu0 0.0
          %342 = vmatprep.mubr.f32.mxu0 0.0
          %343 = vmatmul.mubr.f32.gmra.mxu0 %v273
          %v344 = vpop.f32.mrf.mxu0
          %v345 = vadd.f32 0.0, %v344
          %v346 = vpop.f32.mrf.mxu0
          %347 = vmatprep.mubr.f32.mxu0 0.0
          %348 = vmatmul.mubr.f32.gmra.mxu0 %v276
          %v349 = vpop.f32.mrf.mxu0
          %v350 = vadd.f32 0.0, %v349
          %v351 = vpop.f32.mrf.mxu0
          %352 = vdwg.mxu0
          %vm353 = vcmask 130048
          %v355 = vsel %vm353, %v259, 0
          %v358 = vsel %vm353, %v260, 0
          %v361 = vsel %vm353, %v261, 0
          %v364 = vsel %vm353, %v262, 0
          %366 = vmatprep.subr.mxu0 0.0
          %367 = vmatpush1.msra.mxu0 0.0
          %368 = vmatprep.subr.mxu0 0.0
          %369 = vmatpush1.msra.mxu0 0.0
          %370 = vmatprep.subr.mxu0 0.0
          %371 = vmatpush1.msra.mxu0 0.0
          %372 = vmatprep.subr.mxu0 0.0
          %373 = vmatpush1.msra.mxu0 0.0
          %374 = vmatprep.subr.mxu0 0.0
          %375 = vmatpush1.msra.mxu0 0.0
          %376 = vmatprep.subr.mxu0 0.0
          %377 = vmatpush1.msra.mxu0 0.0
          %378 = vmatprep.subr.mxu0 0.0
          %379 = vmatpush1.msra.mxu0 0.0
          %380 = vmatprep.subr.mxu0 0.0
          %381 = vmatpush1.msra.mxu0 0.0
          %382 = vmatprep.subr.mxu0 0.0
          %383 = vmatpush1.msra.mxu0 0.0
          %384 = vmatprep.subr.mxu0 0.0
          %385 = vmatpush1.msra.mxu0 0.0
          %386 = vmatprep.subr.mxu0 0.0
          %387 = vmatpush1.msra.mxu0 0.0
          %388 = vmatprep.subr.mxu0 0.0
          %389 = vmatpush1.msra.mxu0 0.0
          %390 = vmatprep.subr.mxu0 0.0
          %391 = vmatpush1.msra.mxu0 0.0
          %392 = vmatprep.subr.mxu0 0.0
          %393 = vmatpush1.msra.mxu0 0.0
          %394 = vmatprep.subr.mxu0 0.0
          %395 = vmatpush1.msra.mxu0 %v350
          %396 = vmatprep.subr.mxu0 0.0
          %397 = vmatpush1.msra.mxu0 %v345
          %398 = vmatprep.subr.mxu0 0.0
          %399 = vmatpush2.msra.mxu0 0.0
          %400 = vmatprep.subr.mxu0 0.0
          %401 = vmatpush2.msra.mxu0 0.0
          %402 = vmatprep.subr.mxu0 0.0
          %403 = vmatpush2.msra.mxu0 0.0
          %404 = vmatprep.subr.mxu0 0.0
          %405 = vmatpush2.msra.mxu0 0.0
          %406 = vmatprep.subr.mxu0 0.0
          %407 = vmatpush2.msra.mxu0 0.0
          %408 = vmatprep.subr.mxu0 0.0
          %409 = vmatpush2.msra.mxu0 0.0
          %410 = vmatprep.subr.mxu0 0.0
          %411 = vmatpush2.msra.mxu0 0.0
          %412 = vmatprep.subr.mxu0 0.0
          %413 = vmatpush2.msra.mxu0 0.0
          %414 = vmatprep.subr.mxu0 0.0
          %415 = vmatpush2.msra.mxu0 0.0
          %416 = vmatprep.subr.mxu0 0.0
          %417 = vmatpush2.msra.mxu0 0.0
          %418 = vmatprep.subr.mxu0 0.0
          %419 = vmatpush2.msra.mxu0 0.0
          %420 = vmatprep.subr.mxu0 0.0
          %421 = vmatpush2.msra.mxu0 0.0
          %422 = vmatprep.subr.mxu0 0.0
          %423 = vmatpush2.msra.mxu0 0.0
          %424 = vmatprep.subr.mxu0 0.0
          %425 = vmatpush2.msra.mxu0 0.0
          %426 = vmatprep.subr.mxu0 0.0
          %427 = vmatpush2.msra.mxu0 0.0
          %428 = vmatprep.subr.mxu0 0.0
          %429 = vmatpush2.msra.mxu0 0.0
          %430 = vmatprep.mubr.f32.mxu0 0.0
          %431 = vmatmul.mubr.f32.gmra.mxu0 %v355
          %v432 = vpop.f32.mrf.mxu0
          %v433 = vadd.f32 0.0, %v432
          %v434 = vpop.f32.mrf.mxu0
          %435 = vmatprep.mubr.f32.mxu0 0.0
          %436 = vmatmul.mubr.f32.gmra.mxu0 %v358
          %v437 = vpop.f32.mrf.mxu0
          %v438 = vadd.f32 0.0, %v437
          %v439 = vpop.f32.mrf.mxu0
          %440 = vmatprep.mubr.f32.mxu0 0.0
          %441 = vmatmul.mubr.f32.gmra.mxu0 %v361
          %v442 = vpop.f32.mrf.mxu0
          %v443 = vadd.f32 0.0, %v442
          %v444 = vpop.f32.mrf.mxu0
          %445 = vmatprep.mubr.f32.mxu0 0.0
          %446 = vmatmul.mubr.f32.gmra.mxu0 %v364
          %v447 = vpop.f32.mrf.mxu0
          %v448 = vadd.f32 0.0, %v447
          %v449 = vpop.f32.mrf.mxu0
          %450 = vdwg.mxu0
          %455 = vrot.lane.b32.xlu0 %v433, 1
          %v456 = vpop.permute.xlu0 %455
          %457 = vrot.lane.b32.xlu0 %v438, 1
          %v458 = vpop.permute.xlu0 %457
          %459 = vrot.lane.b32.xlu0 %v443, 1
          %v460 = vpop.permute.xlu0 %459
          %461 = vrot.lane.b32.xlu0 %v448, 1
          %v462 = vpop.permute.xlu0 %461
          %vm467 = vcmask 7168
          %v468 = vsel %vm467, %v433, %v456
          %v469 = vsel %vm467, %v438, %v458
          %v470 = vsel %vm467, %v443, %v460
          %v471 = vsel %vm467, %v448, %v462
          %472 = vrot.lane.b32.xlu0 %v433, 127
          %v473 = vpop.permute.xlu0 %472
          %474 = vrot.lane.b32.xlu0 %v438, 127
          %v475 = vpop.permute.xlu0 %474
          %476 = vrot.lane.b32.xlu0 %v443, 127
          %v477 = vpop.permute.xlu0 %476
          %478 = vrot.lane.b32.xlu0 %v448, 127
          %v479 = vpop.permute.xlu0 %478
          %vm484 = vcmask 1039360
          %v485 = vsel %vm484, %v473, %v433
          %v486 = vsel %vm484, %v475, %v438
          %v487 = vsel %vm484, %v477, %v443
          %v488 = vsel %vm484, %v479, %v448
          %vm489 = vcmask 1040384
          %v490 = vrot.slane %v433, 7
          %v491 = vrot.slane %v438, 7
          %v492 = vsel %vm489, %v490, %v491
          %v493 = vrot.slane %v443, 7
          %v494 = vsel %vm489, %v491, %v493
          %v495 = vrot.slane %v448, 7
          %v496 = vsel %vm489, %v493, %v495
          %v501 = vsel %vm489, %v433, %v490
          %vm502 = vcmask 1046528
          %v503 = vrot.slane %v433, 1
          %v504 = vrot.slane %v438, 1
          %v505 = vsel %vm502, %v503, %v504
          %v506 = vrot.slane %v443, 1
          %v507 = vsel %vm502, %v504, %v506
          %v508 = vrot.slane %v448, 1
          %v509 = vsel %vm502, %v506, %v508
          %v514 = vsel %vm502, %v508, %v448
          %v515 = vlaneseq
          %v516 = vand.u32 %v515, 127
          %vm517 = vcmp.le.s32.totalorder %v516, 30
          %v518 = vsel %vm517, %v485, %v433
          %v519 = vsel %vm517, %v486, %v438
          %v520 = vsel %vm517, %v487, %v443
          %v521 = vsel %vm517, %v488, %v448
          %v522 = vmin.f32 %v468, %v518
          %v523 = vmin.f32 %v469, %v519
          %v524 = vmin.f32 %v470, %v520
          %v525 = vmin.f32 %v471, %v521
          %v526 = vmin.f32 %v501, %v505
          %v527 = vmin.f32 %v492, %v507
          %v528 = vmin.f32 %v494, %v509
          %v529 = vmin.f32 %v496, %v514
          %v530 = vmin.f32 %v522, %v526
          %v531 = vmin.f32 %v523, %v527
          %v532 = vmin.f32 %v524, %v528
          %v533 = vmin.f32 %v525, %v529
          %v534 = vmax.f32 %v468, %v518
          %v535 = vmax.f32 %v469, %v519
          %v536 = vmax.f32 %v470, %v520
          %v537 = vmax.f32 %v471, %v521
          %v538 = vmax.f32 %v501, %v505
          %v539 = vmax.f32 %v492, %v507
          %v540 = vmax.f32 %v494, %v509
          %v541 = vmax.f32 %v496, %v514
          %v542 = vmax.f32 %v534, %v538
          %v543 = vmax.f32 %v535, %v539
          %v544 = vmax.f32 %v536, %v540
          %v545 = vmax.f32 %v537, %v541
          %v546 = vsub.f32 %v530, %v433
          %v547 = vsub.f32 %v531, %v438
          %v548 = vsub.f32 %v532, %v443
          %v549 = vsub.f32 %v533, %v448
          %v550 = vsub.f32 %v542, %v433
          %v551 = vsub.f32 %v543, %v438
          %v552 = vsub.f32 %v544, %v443
          %v553 = vsub.f32 %v545, %v448
          %v554 = vsub.f32 %v550, %v546
          %v555 = vsub.f32 %v551, %v547
          %v556 = vsub.f32 %v552, %v548
          %v557 = vsub.f32 %v553, %v549
          %s558 = smul.f32 %s256, 0.25
          %v559 = vstv %s558
          %vm560 = vcmp.gt.f32.partialorder %v554, %v559
          %vm561 = vcmp.gt.f32.partialorder %v555, %v559
          %vm562 = vcmp.gt.f32.partialorder %v556, %v559
          %vm563 = vcmp.gt.f32.partialorder %v557, %v559
          %s564 = smul.f32 %s256, -0.5
          %v565 = vstv %s564
          %v566 = vsel %vm560, %v565, %v546
          %v567 = vsel %vm561, %v565, %v547
          %v568 = vsel %vm562, %v565, %v548
          %v569 = vsel %vm563, %v565, %v549
          %s570 = smul.f32 %s256, 0.5
          %v571 = vstv %s570
          %v572 = vsel %vm560, %v571, %v550
          %v573 = vsel %vm561, %v571, %v551
          %v574 = vsel %vm562, %v571, %v552
          %v575 = vsel %vm563, %v571, %v553
          %vm576 = vcmp.ge.f32.partialorder %v566, 0.0
          %vm577 = vcmp.ge.f32.partialorder %v567, 0.0
          %vm578 = vcmp.ge.f32.partialorder %v568, 0.0
          %vm579 = vcmp.ge.f32.partialorder %v569, 0.0
          %vm580 = vcmp.le.f32.partialorder %v572, 0.0
          %vm581 = vcmp.le.f32.partialorder %v573, 0.0
          %vm582 = vcmp.le.f32.partialorder %v574, 0.0
          %vm583 = vcmp.le.f32.partialorder %v575, 0.0
          %vm584 = vmor %vm576, %vm580
          %vm585 = vmor %vm577, %vm581
          %vm586 = vmor %vm578, %vm582
          %vm587 = vmor %vm579, %vm583
          %v588 = vsub.f32 %v572, %v566
          %v589 = vsub.f32 %v573, %v567
          %v590 = vsub.f32 %v574, %v568
          %v591 = vsub.f32 %v575, %v569
          %v592 = vstv %s255
          %vm593 = vcmp.lt.f32.partialorder %v588, %v592
          %vm594 = vcmp.lt.f32.partialorder %v589, %v592
          %vm595 = vcmp.lt.f32.partialorder %v590, %v592
          %vm596 = vcmp.lt.f32.partialorder %v591, %v592
          %vm597 = vmor %vm584, %vm593
          %vm598 = vmor %vm585, %vm594
          %vm599 = vmor %vm586, %vm595
          %vm600 = vmor %vm587, %vm596
          %s601 = smul.f32 %s255, -0.5
          %v602 = vstv %s601
          %v603 = vsel %vm597, %v602, %v566
          %v604 = vsel %vm598, %v602, %v567
          %v605 = vsel %vm599, %v602, %v568
          %v606 = vsel %vm600, %v602, %v569
          %s607 = smul.f32 %s255, 0.5
          %v608 = vstv %s607
          %v609 = vsel %vm597, %v608, %v572
          %v610 = vsel %vm598, %v608, %v573
          %v611 = vsel %vm599, %v608, %v574
          %v612 = vsel %vm600, %v608, %v575
          %v613 = vmul.f32 %v603, 1.05
          %v614 = vmul.f32 %v604, 1.05
          %v615 = vmul.f32 %v605, 1.05
          %v616 = vmul.f32 %v606, 1.05
          %v617 = vmul.f32 %v609, 1.05
          %v618 = vmul.f32 %v610, 1.05
          %v619 = vmul.f32 %v611, 1.05
          %v620 = vmul.f32 %v612, 1.05
          %v621 = vadd.f32 %v433, %v613
          %v622 = vadd.f32 %v438, %v614
          %v623 = vadd.f32 %v443, %v615
          %v624 = vadd.f32 %v448, %v616
          %625 = vst [vmem:[#allocation2] sm:$0xff] %v621
          %626 = vst [vmem:[#allocation2 + $0x8] sm:$0xff] %v622
          %627 = vst [vmem:[#allocation2 + $0x10] sm:$0xff] %v623
          %628 = vst [vmem:[#allocation2 + $0x18] sm:$0xff] %v624
          %v629 = vsub.f32 %v617, %v613
          %v630 = vsub.f32 %v618, %v614
          %v631 = vsub.f32 %v619, %v615
          %v632 = vsub.f32 %v620, %v616
          %v633 = vmul.f32 %v629, 0.14285715
          %v634 = vmul.f32 %v630, 0.14285715
          %v635 = vmul.f32 %v631, 0.14285715
          %v636 = vmul.f32 %v632, 0.14285715
          %637 = vst [vmem:[#allocation3] sm:$0xff] %v633
          %638 = vst [vmem:[#allocation3 + $0x8] sm:$0xff] %v634
          %639 = vst [vmem:[#allocation3 + $0x10] sm:$0xff] %v635
          %640 = vst [vmem:[#allocation3 + $0x18] sm:$0xff] %v636
        $region48: #{tpu_custom_call.1} parent=35 // pred_fallthru
          _
        %v641 = vld [vmem:[#allocation2] sm:$0xff]
        %v642 = vld [vmem:[#allocation2 + $0x8] sm:$0xff]
        %v643 = vld [vmem:[#allocation2 + $0x10] sm:$0xff]
        %v644 = vld [vmem:[#allocation2 + $0x18] sm:$0xff]
        %v645 = vld [vmem:[#allocation3] sm:$0xff]
        %v646 = vld [vmem:[#allocation3 + $0x8] sm:$0xff]
        %v647 = vld [vmem:[#allocation3 + $0x10] sm:$0xff]
        %v648 = vld [vmem:[#allocation3 + $0x18] sm:$0xff]
        %s649 = scvt.s32.f32 %s26
        %v650 = vstv %s649
        %v651 = vmul.f32 %v645, %v650
        %v652 = vmul.f32 %v646, %v650
        %v653 = vmul.f32 %v647, %v650
        %v654 = vmul.f32 %v648, %v650
        %v655 = vadd.f32 %v641, %v651
        %v656 = vadd.f32 %v642, %v652
        %v657 = vadd.f32 %v643, %v653
        %v658 = vadd.f32 %v644, %v654
        %659 = vst [vmem:[%s242] sm:$0xff] %v655
        %660 = vst [vmem:[%s242 + $0x8] sm:$0xff] %v656
        %661 = vst [vmem:[%s242 + $0x10] sm:$0xff] %v657
        %662 = vst [vmem:[%s242 + $0x18] sm:$0xff] %v658
        %s663 = sand.u32 %s140, 1
        %s664 = scalar_lea.sflag [#allocation6], %s663
        %s665 = sand.u32 %s140, 1
        %s666 = smul.addr %s665, 32
        %s667 = scalar_lea.vmem [#allocation9], %s666
        // Predicated region
        $region49: #{tpu_custom_call.1} parent=35 // pred_check
          %p668 = pneg %p150
        $region50: #{tpu_custom_call.1} parent=35 // pred_check_branch
          %670 = sbr.rel (%p668) target = $region52
        $region51: #{tpu_custom_call.1} parent=35 // pred_region
          %s671 = smul.u32 4, %s27
          %s673 = ssub.s32 512, 512
          %674 = vsyncadd %s664, %s673
          %s675 = smul.addr %s26, 4
          %s676 = sadd.s32 %s671, %s675
          %s677 = smul.addr %s25, 32
          %s678 = sadd.s32 %s676, %s677
          %s679 = smul.addr %s678, 128
          %s680 = scalar_lea.hbm %s4, %s679
          %s681 = sshll.u32 %s667, 4
          %s682 = int_to_ptr.vmem [resolvable:$true] %s681
          %687 = dma.vmem_to_hbm [thread:$0]  %s682, 512, %s680, %s664, 128, 128, 8
        $region52: #{tpu_custom_call.1} parent=35 // pred_fallthru
          _
      $region36: #{tpu_custom_call.1} parent=5 // pred_fallthru
        _
      %p688 = scmp.le.s32.totalorder 2, %s15
      // Predicated region
      $region53: #{tpu_custom_call.1} parent=5 // pred_check
        %p689 = pneg %p688
      $region54: #{tpu_custom_call.1} parent=5 // pred_check_branch
        %691 = sbr.rel (%p689) target = $region56
      $region55: #{tpu_custom_call.1} parent=5 // pred_region
        %s692 = ssub.s32 %s15, 2
        // Predicated region
        $region57: #{tpu_custom_call.1} parent=55 // pred_check
          %p693 = pneg %p156
        $region58: #{tpu_custom_call.1} parent=55 // pred_check_branch
          %695 = sbr.rel (%p693) target = $region60
        $region59: #{tpu_custom_call.1} parent=55 // pred_region
          %s696 = sand.u32 %s141, 1
          %s697 = scalar_lea.sflag [#allocation6], %s696
          %s698 = sand.u32 %s141, 1
          %s699 = smul.addr %s698, 32
          %s700 = scalar_lea.vmem [#allocation9], %s699
          %701 = dma.done %s697, 512
        $region60: #{tpu_custom_call.1} parent=55 // pred_fallthru
          _
      $region56: #{tpu_custom_call.1} parent=5 // pred_fallthru
        _
    $region6: #{tpu_custom_call.1} parent=1 // loop_footer
      %s19 = sadd.s32 1, %s15
    $region7: #{tpu_custom_call.1} parent=1 // loop_footer_branch
      %14 = sbr.rel target = $region3
    $region8: #{tpu_custom_call.1} parent=1 // loop_exit
      _
    %702 = vsyncpa [#allocation5], 1
    %s703 = scalar_lea.sflag [#allocation5], 1
    %704 = vsyncpa %s703, 1
    %705 = vsyncpa [#allocation6], 1
    %s706 = scalar_lea.sflag [#allocation6], 1
    %707 = vsyncpa %s706, 1
    %708 = vsyncpa [#allocation7], 1
    %s709 = scalar_lea.sflag [#allocation7], 1
    %710 = vsyncpa %s709, 1

</llo_original>
